<compile_context>
chip_gen: v7x
topology: tpu7x:2x2x1
jax: 0.10.0
libtpu: 0.0.40
codegen_flags: <defaults>
</compile_context>

<pallas_src>
import functools

import jax
import jax.numpy as jnp
import numpy as np
from jax.experimental import pallas as pl
from jax.experimental.pallas import tpu as pltpu

# ----------------------------- hyper-params ---------------------------------
B = 2            # batch
N_HALF = 4       # channels in each half of z  (z has 2*N_HALF = 8 channels)
T = 128          # time steps
N_MEL = 8        # conditioning (spect) channels
NC = 32          # WN hidden channels
L = 2            # WN layers
DILATIONS = (1, 2)
N_SPEAKERS = 4

N = B * T                     # batch folded onto lanes: 256
START_K = 8                   # start-conv contraction dim (N_HALF + ones row, padded)
COND_K = N_MEL + B            # spect + one-hot batch indicator rows: 10
COND_KP = 16                  # padded to a clean sublane multiple for bf16


# ------------------------------ Pallas kernel -------------------------------
def coupling_kernel(a0aug_ref, a1_ref, cond_ref,
                    w_start_ref, w_cond_ref, w_layer_ref,
                    w_mid_ref, b_res_ref, w_last_ref, b_endf_ref,
                    out_ref, x_ref):
    """Single-invocation kernel, everything laid out (channels, B*T).

    x_ref (VMEM scratch, (3*NC, N) bf16) holds the fused-matmul operand:
        rows [0:NC)     x_l  (h shifted right by dilation, zero at segment start)
        rows [NC:2NC)   h
        rows [2NC:3NC)  x_r  (h shifted left by dilation, zero at segment end)
    Conditioning (spect / speaker / per-layer biases) is loop-invariant and is
    applied through the hoisted g_cond matmul below.
    """
    dot = functools.partial(jnp.dot, preferred_element_type=jnp.float32)
    bf16 = jnp.bfloat16

    # Hoisted loop-invariant conditioning:
    #   g_cond[i*2NC:(i+1)*2NC] = w_cond[i] @ spect + (w_spk[i]@emb + b_in + b_cond)[batch]
    # (per-batch bias enters through the one-hot indicator rows of cond_ref).
    g_cond = dot(w_cond_ref[...], cond_ref[...])                  # (L*2NC, N) f32

    # start conv (bias folded into the weight via a ones row in a0_aug)
    h = jnp.tanh(dot(w_start_ref[...], a0aug_ref[...]))           # (NC, N) f32

    # within-segment time index (batch is folded along lanes -> mask boundaries)
    pos = jax.lax.broadcasted_iota(jnp.int32, (NC, N), 1) % T

    end = jnp.zeros((2 * N_HALF, N), jnp.float32)                 # folded skip/end acc

    for i in range(L):
        d = DILATIONS[i]
        # h[t-d] / h[t+d] via XLU rotation, zeroing the lanes that would wrap
        # across the conv zero-padding or across a batch-segment boundary.
        x_l = jnp.where(pos < d, 0.0, pltpu.roll(h, shift=d, axis=1))
        x_r = jnp.where(pos >= T - d, 0.0, pltpu.roll(h, shift=N - d, axis=1))

        x_ref[0:NC, :] = x_l.astype(bf16)
        x_ref[NC:2 * NC, :] = h.astype(bf16)
        x_ref[2 * NC:3 * NC, :] = x_r.astype(bf16)

        # one fused (2NC, 3NC) @ (3NC, N) bf16 matmul (3 conv taps), f32 accumulate
        g = dot(w_layer_ref[i], x_ref[...]) + g_cond[i * 2 * NC:(i + 1) * 2 * NC]

        # gated tanh; sigmoid(x) = 0.5*tanh(0.5*x) + 0.5  (one EUP push, FMA on VPU)
        acts = jnp.tanh(g[:NC]) * (0.5 * jnp.tanh(0.5 * g[NC:]) + 0.5)
        acts_b = acts.astype(bf16)

        if i < L - 1:
            # [residual half of w_rs ; w_end @ (skip half of w_rs)] in one matmul
            rs = dot(w_mid_ref[i], acts_b)                        # (NC+2*N_HALF, N)
            h = h + rs[:NC] + b_res_ref[i]
            end = end + rs[NC:]
        else:
            # last layer: residual half is dead, only the folded skip matmul
            end = end + dot(w_last_ref[...], acts_b)              # (2*N_HALF, N)

    end = end + b_endf_ref[...]                                   # folded biases
    log_s = end[:N_HALF]
    t = end[N_HALF:]

    # two sublane slice stores into the single lane-dense (8, N) output slab
    out_ref[0:N_HALF, :] = a1_ref[...] * jnp.exp(log_s) + t
    out_ref[N_HALF:, :] = log_s


# ------------------------------ wrapper --------------------------------------
def affine_coupling_forward(z, spect, speaker_ids, params):
    """forward(z, spect, speaker_ids) -> (audio_out, log_s)   [all (B, C, T)]"""
    a0 = z[:, :N_HALF]                                    # (B, N_HALF, T)
    a1 = z[:, N_HALF:]

    def fold(x):                                          # (B, C, T) -> (C, B*T)
        return jnp.transpose(x, (1, 0, 2)).reshape(x.shape[1], N)

    a0_fold = fold(a0)
    a1_fold = fold(a1)
    spect_fold = fold(spect)

    # start conv: fold the bias into the weight via an appended ones row,
    # pad the contraction dim to 8 rows.
    a0_aug = jnp.concatenate(
        [a0_fold, jnp.ones((1, N), jnp.float32),
         jnp.zeros((START_K - N_HALF - 1, N), jnp.float32)], axis=0)     # (8, N)
    w_start_aug = jnp.concatenate(
        [params["w_start"], params["b_start"],
         jnp.zeros((NC, START_K - N_HALF - 1), jnp.float32)], axis=1)    # (NC, 8)

    # per-layer, per-batch bias (speaker embedding matmul + b_in + b_cond),
    # precomputed here so the kernel never does a lane-width-1 matmul.
    spk_emb = params["emb"][speaker_ids]                                 # (B, NC)
    spk_bias = (jnp.einsum("lcn,bn->lcb", params["w_spk"], spk_emb)
                + params["b_in"] + params["b_cond"])                     # (L, 2NC, B)

    # one-hot batch indicator along the folded lane axis: row b is 1 on batch b's
    # T columns -> multiplying by spk_bias columns broadcasts the per-batch bias.
    indicator = (jnp.arange(B)[:, None]
                 == (jnp.arange(N)[None, :] // T)).astype(jnp.float32)   # (B, N)
    cond_pack = jnp.concatenate(
        [spect_fold, indicator,
         jnp.zeros((COND_KP - COND_K, N), jnp.float32)], axis=0)         # (16, N)

    # hoisted conditioning weight slab: per layer [w_cond | spk_bias | 0]
    w_cond_slab = jnp.concatenate(
        [params["w_cond"], spk_bias,
         jnp.zeros((L, 2 * NC, COND_KP - COND_K), jnp.float32)],
        axis=2).reshape(L * 2 * NC, COND_KP)                             # (L*2NC, 16)

    # per-layer fused dilated-conv taps: [w_in0 | w_in1 | w_in2]
    w_layer = jnp.concatenate(
        [params["w_in"][:, 0], params["w_in"][:, 1], params["w_in"][:, 2]],
        axis=2)                                                          # (L, 2NC, 3NC)

    # algebraic folding of w_end into the skip half of w_rs:
    #   end = sum_i (w_end @ w_rs[i][NC:]) @ acts_i + w_end @ sum_i b_rs[i][NC:] + b_end
    w_skip_fold = jnp.einsum("en,lnc->lec",
                             params["w_end"], params["w_rs"][:, NC:])    # (L, 8, NC)
    w_mid = jnp.concatenate(
        [params["w_rs"][:L - 1, :NC], w_skip_fold[:L - 1]], axis=1)      # (L-1, NC+8, NC)
    b_res = params["b_rs"][:L - 1, :NC]                                  # (L-1, NC, 1)
    w_last = w_skip_fold[L - 1]                                          # (8, NC)
    b_end_fold = (params["w_end"] @ jnp.sum(params["b_rs"][:, NC:], axis=0)
                  + params["b_end"])                                     # (8, 1)

    bf = jnp.bfloat16
    out = pl.pallas_call(
        coupling_kernel,
        out_shape=jax.ShapeDtypeStruct((2 * N_HALF, N), jnp.float32),
        scratch_shapes=[pltpu.VMEM((3 * NC, N), jnp.bfloat16)],
    )(a0_aug.astype(bf), a1_fold, cond_pack.astype(bf),
      w_start_aug.astype(bf), w_cond_slab.astype(bf), w_layer.astype(bf),
      w_mid.astype(bf), b_res, w_last.astype(bf), b_end_fold)

    out = out.reshape(2 * N_HALF, B, T).transpose(1, 0, 2)               # (B, 8, T)
    a1_out = out[:, :N_HALF]
    log_s = out[:, N_HALF:]
    # the untouched a0 half never round-trips through the kernel
    audio_out = jnp.concatenate([a0, a1_out], axis=1)
    return audio_out, log_s


# --------------------------- pure-JAX reference ------------------------------
def forward_ref(z, spect, speaker_ids, params):
    a0 = z[:, :N_HALF]
    a1 = z[:, N_HALF:]
    spk_emb = params["emb"][speaker_ids][:, :, None]

    def single(a0b, a1b, spectb, spkb):
        h = jnp.tanh(params["w_start"] @ a0b + params["b_start"])
        skip = jnp.zeros((NC, T), jnp.float32)
        for i in range(L):
            d = DILATIONS[i]
            zpad = jnp.zeros((NC, d), jnp.float32)
            x_l = jnp.concatenate([zpad, h[:, :T - d]], axis=1)
            x_r = jnp.concatenate([h[:, d:], zpad], axis=1)
            w = params["w_in"][i]
            x_in = w[0] @ x_l + w[1] @ h + w[2] @ x_r + params["b_in"][i]
            cond = (params["w_cond"][i] @ spectb + params["b_cond"][i]
                    + params["w_spk"][i] @ spkb)
            g = x_in + cond
            acts = jnp.tanh(g[:NC]) * jax.nn.sigmoid(g[NC:])
            rs = params["w_rs"][i] @ acts + params["b_rs"][i]
            h = h + rs[:NC]
            skip = skip + rs[NC:]
        end = params["w_end"] @ skip + params["b_end"]
        log_s, t = end[:N_HALF], end[N_HALF:]
        return jnp.concatenate([a0b, a1b * jnp.exp(log_s) + t], 0), log_s

    return jax.vmap(single)(a0, a1, spect, spk_emb)


# ------------------------------ params ---------------------------------------
def init_params(key):
    ks = jax.random.split(key, 12)
    s = 0.1
    return {
        "emb":     s * jax.random.normal(ks[0], (N_SPEAKERS, NC), jnp.float32),
        "w_start": s * jax.random.normal(ks[1], (NC, N_HALF), jnp.float32),
        "b_start": s * jax.random.normal(ks[2], (NC, 1), jnp.float32),
        "w_in":    s * jax.random.normal(ks[3], (L, 3, 2 * NC, NC), jnp.float32),
        "b_in":    s * jax.random.normal(ks[4], (L, 2 * NC, 1), jnp.float32),
        "w_cond":  s * jax.random.normal(ks[5], (L, 2 * NC, N_MEL), jnp.float32),
        "b_cond":  s * jax.random.normal(ks[6], (L, 2 * NC, 1), jnp.float32),
        "w_spk":   s * jax.random.normal(ks[7], (L, 2 * NC, NC), jnp.float32),
        "w_rs":    s * jax.random.normal(ks[8], (L, 2 * NC, NC), jnp.float32),
        "b_rs":    s * jax.random.normal(ks[9], (L, 2 * NC, 1), jnp.float32),
        "w_end":   s * jax.random.normal(ks[10], (2 * N_HALF, NC), jnp.float32),
        "b_end":   s * jax.random.normal(ks[11], (2 * N_HALF, 1), jnp.float32),
    }


# ------------------------------- main -----------------------------------------
if __name__ == "__main__":
    key = jax.random.PRNGKey(0)
    kz, ksp, kid, kp = jax.random.split(key, 4)

    z = jax.random.normal(kz, (B, 2 * N_HALF, T), jnp.float32)
    spect = jax.random.normal(ksp, (B, N_MEL, T), jnp.float32)
    speaker_ids = jax.random.randint(kid, (B,), 0, N_SPEAKERS)
    params = init_params(kp)

    audio_out, log_s = jax.block_until_ready(
        affine_coupling_forward(z, spect, speaker_ids, params))

    ref_out, ref_logs = jax.block_until_ready(
        forward_ref(z, spect, speaker_ids, params))

    # MXU operands are bf16 (per perf review); accumulation / exp / affine are f32,
    # so compare against the pure-f32 reference with a bf16-appropriate tolerance.
    np.testing.assert_allclose(np.asarray(audio_out), np.asarray(ref_out),
                               rtol=3e-2, atol=3e-2)
    np.testing.assert_allclose(np.asarray(log_s), np.asarray(ref_logs),
                               rtol=3e-2, atol=3e-2)

    # TODO(synk): memory-efficient autograd (AffineCouplingFunc/InvAffineCouplingFunc
    # backward, storage().resize_) and the inverse() path are not implemented;
    # only the forward pass is.
    print("KERNEL_OK")
</pallas_src>

<mosaic_0001>
module attributes {stable_mosaic.version = 11 : i64} {
  func.func @coupling_kernel(%arg0: memref<8x256xbf16, #tpu.memory_space<vmem>>, %arg1: memref<4x256xf32, #tpu.memory_space<vmem>>, %arg2: memref<16x256xbf16, #tpu.memory_space<vmem>>, %arg3: memref<32x8xbf16, #tpu.memory_space<vmem>>, %arg4: memref<128x16xbf16, #tpu.memory_space<vmem>>, %arg5: memref<2x64x96xbf16, #tpu.memory_space<vmem>>, %arg6: memref<1x40x32xbf16, #tpu.memory_space<vmem>>, %arg7: memref<1x32x1xf32, #tpu.memory_space<vmem>>, %arg8: memref<8x32xbf16, #tpu.memory_space<vmem>>, %arg9: memref<8x1xf32, #tpu.memory_space<vmem>>, %arg10: memref<8x256xf32, #tpu.memory_space<vmem>>, %arg11: memref<96x256xbf16, #tpu.memory_space<vmem>>) attributes {dimension_semantics = [], scalar_prefetch = 0 : i64, scratch_operands = 1 : i64, tpu.core_type = #tpu.core_type<tc>} {
    %c0 = arith.constant 0 : index
    %c0_0 = arith.constant 0 : index
    %0 = vector.load %arg4[%c0, %c0_0] : memref<128x16xbf16, #tpu.memory_space<vmem>>, vector<128x16xbf16>
    %c0_1 = arith.constant 0 : index
    %c0_2 = arith.constant 0 : index
    %1 = vector.load %arg2[%c0_1, %c0_2] : memref<16x256xbf16, #tpu.memory_space<vmem>>, vector<16x256xbf16>
    %cst = arith.constant dense<0.000000e+00> : vector<128x256xf32>
    %2 = tpu.matmul %0, %1, %cst {dimension_numbers = #tpu.dot_dimension_numbers<[1], [0], [0], [1], [0, 0, 1, 1], [], []>} : vector<128x16xbf16>, vector<16x256xbf16>, vector<128x256xf32> -> vector<128x256xf32>
    %c0_3 = arith.constant 0 : index
    %c0_4 = arith.constant 0 : index
    %3 = vector.load %arg3[%c0_3, %c0_4] : memref<32x8xbf16, #tpu.memory_space<vmem>>, vector<32x8xbf16>
    %c0_5 = arith.constant 0 : index
    %c0_6 = arith.constant 0 : index
    %4 = vector.load %arg0[%c0_5, %c0_6] : memref<8x256xbf16, #tpu.memory_space<vmem>>, vector<8x256xbf16>
    %cst_7 = arith.constant dense<0.000000e+00> : vector<32x256xf32>
    %5 = tpu.matmul %3, %4, %cst_7 {dimension_numbers = #tpu.dot_dimension_numbers<[1], [0], [0], [1], [0, 0, 1, 1], [], []>} : vector<32x8xbf16>, vector<8x256xbf16>, vector<32x256xf32> -> vector<32x256xf32>
    %6 = math.tanh %5 : vector<32x256xf32>
    %7 = tpu.iota {dimensions = array<i32: 1>} : vector<32x256xi32>
    %c128_i32 = arith.constant 128 : i32
    %c0_i32 = arith.constant 0 : i32
    %8 = arith.cmpi eq, %c128_i32, %c0_i32 : i32
    %c1_i32 = arith.constant 1 : i32
    %9 = arith.select %8, %c1_i32, %c128_i32 : i32
    %10 = vector.broadcast %9 : i32 to vector<32x256xi32>
    %11 = arith.remsi %7, %10 : vector<32x256xi32>
    %c0_i32_8 = arith.constant 0 : i32
    %12 = vector.broadcast %c0_i32_8 : i32 to vector<32x256xi32>
    %13 = arith.cmpi ne, %11, %12 : vector<32x256xi32>
    %c0_i32_9 = arith.constant 0 : i32
    %14 = vector.broadcast %c0_i32_9 : i32 to vector<32x256xi32>
    %15 = arith.cmpi slt, %11, %14 : vector<32x256xi32>
    %c0_i32_10 = arith.constant 0 : i32
    %16 = arith.cmpi slt, %9, %c0_i32_10 : i32
    %17 = vector.broadcast %16 : i1 to vector<32x256xi1>
    %18 = vector.broadcast %17 : vector<32x256xi1> to vector<32x256xi1>
    %19 = arith.xori %15, %18 : vector<32x256xi1>
    %20 = arith.andi %19, %13 : vector<32x256xi1>
    %21 = vector.broadcast %9 : i32 to vector<32x256xi32>
    %22 = arith.addi %11, %21 : vector<32x256xi32>
    %23 = arith.select %20, %22, %11 : vector<32x256xi1>, vector<32x256xi32>
    %cst_11 = arith.constant 0.000000e+00 : f32
    %24 = vector.broadcast %cst_11 : f32 to vector<8x256xf32>
    %c1_i32_12 = arith.constant 1 : i32
    %25 = vector.broadcast %c1_i32_12 : i32 to vector<32x256xi32>
    %26 = arith.cmpi slt, %23, %25 : vector<32x256xi32>
    %c1_i32_13 = arith.constant 1 : i32
    %27 = tpu.dynamic_rotate %6 by %c1_i32_13 dim 1 : vector<32x256xf32>, i32 -> vector<32x256xf32>
    %cst_14 = arith.constant 0.000000e+00 : f32
    %28 = vector.broadcast %cst_14 : f32 to vector<32x256xf32>
    %29 = arith.select %26, %28, %27 : vector<32x256xi1>, vector<32x256xf32>
    %c127_i32 = arith.constant 127 : i32
    %30 = vector.broadcast %c127_i32 : i32 to vector<32x256xi32>
    %31 = arith.cmpi sge, %23, %30 : vector<32x256xi32>
    %c255_i32 = arith.constant 255 : i32
    %32 = tpu.dynamic_rotate %6 by %c255_i32 dim 1 : vector<32x256xf32>, i32 -> vector<32x256xf32>
    %cst_15 = arith.constant 0.000000e+00 : f32
    %33 = vector.broadcast %cst_15 : f32 to vector<32x256xf32>
    %34 = arith.select %31, %33, %32 : vector<32x256xi1>, vector<32x256xf32>
    %35 = arith.truncf %29 : vector<32x256xf32> to vector<32x256xbf16>
    %c0_16 = arith.constant 0 : index
    %c0_17 = arith.constant 0 : index
    %36 = vector.load %arg11[%c0_16, %c0_17] : memref<96x256xbf16, #tpu.memory_space<vmem>>, vector<32x256xbf16>
    tpu.vector_store %arg11[%c0_16, %c0_17], %35 {strides = array<i32>} : memref<96x256xbf16, #tpu.memory_space<vmem>>, vector<32x256xbf16>,
    %37 = arith.truncf %6 : vector<32x256xf32> to vector<32x256xbf16>
    %c32 = arith.constant 32 : index
    %c0_18 = arith.constant 0 : index
    %38 = vector.load %arg11[%c32, %c0_18] : memref<96x256xbf16, #tpu.memory_space<vmem>>, vector<32x256xbf16>
    tpu.vector_store %arg11[%c32, %c0_18], %37 {strides = array<i32>} : memref<96x256xbf16, #tpu.memory_space<vmem>>, vector<32x256xbf16>,
    %39 = arith.truncf %34 : vector<32x256xf32> to vector<32x256xbf16>
    %c64 = arith.constant 64 : index
    %c0_19 = arith.constant 0 : index
    %40 = vector.load %arg11[%c64, %c0_19] : memref<96x256xbf16, #tpu.memory_space<vmem>>, vector<32x256xbf16>
    tpu.vector_store %arg11[%c64, %c0_19], %39 {strides = array<i32>} : memref<96x256xbf16, #tpu.memory_space<vmem>>, vector<32x256xbf16>,
    %c0_20 = arith.constant 0 : index
    %c0_21 = arith.constant 0 : index
    %c0_22 = arith.constant 0 : index
    %41 = vector.load %arg5[%c0_20, %c0_21, %c0_22] : memref<2x64x96xbf16, #tpu.memory_space<vmem>>, vector<1x64x96xbf16>
    %42 = vector.shape_cast %41 : vector<1x64x96xbf16> to vector<64x96xbf16>
    %c0_23 = arith.constant 0 : index
    %c0_24 = arith.constant 0 : index
    %43 = vector.load %arg11[%c0_23, %c0_24] : memref<96x256xbf16, #tpu.memory_space<vmem>>, vector<96x256xbf16>
    %cst_25 = arith.constant dense<0.000000e+00> : vector<64x256xf32>
    %44 = tpu.matmul %42, %43, %cst_25 {dimension_numbers = #tpu.dot_dimension_numbers<[1], [0], [0], [1], [0, 0, 1, 1], [], []>} : vector<64x96xbf16>, vector<96x256xbf16>, vector<64x256xf32> -> vector<64x256xf32>
    %45 = vector.extract_strided_slice %2 {offsets = [0, 0], sizes = [64, 256], strides = [1, 1]} : vector<128x256xf32> to vector<64x256xf32>
    %46 = arith.addf %44, %45 : vector<64x256xf32>
    %47 = vector.extract_strided_slice %46 {offsets = [0, 0], sizes = [32, 256], strides = [1, 1]} : vector<64x256xf32> to vector<32x256xf32>
    %48 = math.tanh %47 : vector<32x256xf32>
    %49 = vector.extract_strided_slice %46 {offsets = [32, 0], sizes = [32, 256], strides = [1, 1]} : vector<64x256xf32> to vector<32x256xf32>
    %cst_26 = arith.constant 5.000000e-01 : f32
    %50 = vector.broadcast %cst_26 : f32 to vector<32x256xf32>
    %51 = arith.mulf %50, %49 : vector<32x256xf32>
    %52 = math.tanh %51 : vector<32x256xf32>
    %cst_27 = arith.constant 5.000000e-01 : f32
    %53 = vector.broadcast %cst_27 : f32 to vector<32x256xf32>
    %54 = arith.mulf %53, %52 : vector<32x256xf32>
    %cst_28 = arith.constant 5.000000e-01 : f32
    %55 = vector.broadcast %cst_28 : f32 to vector<32x256xf32>
    %56 = arith.addf %54, %55 : vector<32x256xf32>
    %57 = arith.mulf %48, %56 : vector<32x256xf32>
    %58 = arith.truncf %57 : vector<32x256xf32> to vector<32x256xbf16>
    %c0_29 = arith.constant 0 : index
    %c0_30 = arith.constant 0 : index
    %c0_31 = arith.constant 0 : index
    %59 = vector.load %arg6[%c0_29, %c0_30, %c0_31] : memref<1x40x32xbf16, #tpu.memory_space<vmem>>, vector<1x40x32xbf16>
    %60 = vector.shape_cast %59 : vector<1x40x32xbf16> to vector<40x32xbf16>
    %cst_32 = arith.constant dense<0.000000e+00> : vector<40x256xf32>
    %61 = tpu.matmul %60, %58, %cst_32 {dimension_numbers = #tpu.dot_dimension_numbers<[1], [0], [0], [1], [0, 0, 1, 1], [], []>} : vector<40x32xbf16>, vector<32x256xbf16>, vector<40x256xf32> -> vector<40x256xf32>
    %62 = vector.extract_strided_slice %61 {offsets = [0, 0], sizes = [32, 256], strides = [1, 1]} : vector<40x256xf32> to vector<32x256xf32>
    %63 = arith.addf %6, %62 : vector<32x256xf32>
    %c0_33 = arith.constant 0 : index
    %c0_34 = arith.constant 0 : index
    %c0_35 = arith.constant 0 : index
    %64 = vector.load %arg7[%c0_33, %c0_34, %c0_35] : memref<1x32x1xf32, #tpu.memory_space<vmem>>, vector<1x32x1xf32>
    %65 = vector.shape_cast %64 : vector<1x32x1xf32> to vector<32x1xf32>
    %66 = vector.broadcast %65 : vector<32x1xf32> to vector<32x256xf32>
    %67 = arith.addf %63, %66 : vector<32x256xf32>
    %68 = vector.extract_strided_slice %61 {offsets = [32, 0], sizes = [8, 256], strides = [1, 1]} : vector<40x256xf32> to vector<8x256xf32>
    %69 = arith.addf %24, %68 : vector<8x256xf32>
    %c2_i32 = arith.constant 2 : i32
    %70 = vector.broadcast %c2_i32 : i32 to vector<32x256xi32>
    %71 = arith.cmpi slt, %23, %70 : vector<32x256xi32>
    %c2_i32_36 = arith.constant 2 : i32
    %72 = tpu.dynamic_rotate %67 by %c2_i32_36 dim 1 : vector<32x256xf32>, i32 -> vector<32x256xf32>
    %cst_37 = arith.constant 0.000000e+00 : f32
    %73 = vector.broadcast %cst_37 : f32 to vector<32x256xf32>
    %74 = arith.select %71, %73, %72 : vector<32x256xi1>, vector<32x256xf32>
    %c126_i32 = arith.constant 126 : i32
    %75 = vector.broadcast %c126_i32 : i32 to vector<32x256xi32>
    %76 = arith.cmpi sge, %23, %75 : vector<32x256xi32>
    %c254_i32 = arith.constant 254 : i32
    %77 = tpu.dynamic_rotate %67 by %c254_i32 dim 1 : vector<32x256xf32>, i32 -> vector<32x256xf32>
    %cst_38 = arith.constant 0.000000e+00 : f32
    %78 = vector.broadcast %cst_38 : f32 to vector<32x256xf32>
    %79 = arith.select %76, %78, %77 : vector<32x256xi1>, vector<32x256xf32>
    %80 = arith.truncf %74 : vector<32x256xf32> to vector<32x256xbf16>
    %c0_39 = arith.constant 0 : index
    %c0_40 = arith.constant 0 : index
    %81 = vector.load %arg11[%c0_39, %c0_40] : memref<96x256xbf16, #tpu.memory_space<vmem>>, vector<32x256xbf16>
    tpu.vector_store %arg11[%c0_39, %c0_40], %80 {strides = array<i32>} : memref<96x256xbf16, #tpu.memory_space<vmem>>, vector<32x256xbf16>,
    %82 = arith.truncf %67 : vector<32x256xf32> to vector<32x256xbf16>
    %c32_41 = arith.constant 32 : index
    %c0_42 = arith.constant 0 : index
    %83 = vector.load %arg11[%c32_41, %c0_42] : memref<96x256xbf16, #tpu.memory_space<vmem>>, vector<32x256xbf16>
    tpu.vector_store %arg11[%c32_41, %c0_42], %82 {strides = array<i32>} : memref<96x256xbf16, #tpu.memory_space<vmem>>, vector<32x256xbf16>,
    %84 = arith.truncf %79 : vector<32x256xf32> to vector<32x256xbf16>
    %c64_43 = arith.constant 64 : index
    %c0_44 = arith.constant 0 : index
    %85 = vector.load %arg11[%c64_43, %c0_44] : memref<96x256xbf16, #tpu.memory_space<vmem>>, vector<32x256xbf16>
    tpu.vector_store %arg11[%c64_43, %c0_44], %84 {strides = array<i32>} : memref<96x256xbf16, #tpu.memory_space<vmem>>, vector<32x256xbf16>,
    %c1 = arith.constant 1 : index
    %c0_45 = arith.constant 0 : index
    %c0_46 = arith.constant 0 : index
    %86 = vector.load %arg5[%c1, %c0_45, %c0_46] : memref<2x64x96xbf16, #tpu.memory_space<vmem>>, vector<1x64x96xbf16>
    %87 = vector.shape_cast %86 : vector<1x64x96xbf16> to vector<64x96xbf16>
    %c0_47 = arith.constant 0 : index
    %c0_48 = arith.constant 0 : index
    %88 = vector.load %arg11[%c0_47, %c0_48] : memref<96x256xbf16, #tpu.memory_space<vmem>>, vector<96x256xbf16>
    %cst_49 = arith.constant dense<0.000000e+00> : vector<64x256xf32>
    %89 = tpu.matmul %87, %88, %cst_49 {dimension_numbers = #tpu.dot_dimension_numbers<[1], [0], [0], [1], [0, 0, 1, 1], [], []>} : vector<64x96xbf16>, vector<96x256xbf16>, vector<64x256xf32> -> vector<64x256xf32>
    %90 = vector.extract_strided_slice %2 {offsets = [64, 0], sizes = [64, 256], strides = [1, 1]} : vector<128x256xf32> to vector<64x256xf32>
    %91 = arith.addf %89, %90 : vector<64x256xf32>
    %92 = vector.extract_strided_slice %91 {offsets = [0, 0], sizes = [32, 256], strides = [1, 1]} : vector<64x256xf32> to vector<32x256xf32>
    %93 = math.tanh %92 : vector<32x256xf32>
    %94 = vector.extract_strided_slice %91 {offsets = [32, 0], sizes = [32, 256], strides = [1, 1]} : vector<64x256xf32> to vector<32x256xf32>
    %cst_50 = arith.constant 5.000000e-01 : f32
    %95 = vector.broadcast %cst_50 : f32 to vector<32x256xf32>
    %96 = arith.mulf %95, %94 : vector<32x256xf32>
    %97 = math.tanh %96 : vector<32x256xf32>
    %cst_51 = arith.constant 5.000000e-01 : f32
    %98 = vector.broadcast %cst_51 : f32 to vector<32x256xf32>
    %99 = arith.mulf %98, %97 : vector<32x256xf32>
    %cst_52 = arith.constant 5.000000e-01 : f32
    %100 = vector.broadcast %cst_52 : f32 to vector<32x256xf32>
    %101 = arith.addf %99, %100 : vector<32x256xf32>
    %102 = arith.mulf %93, %101 : vector<32x256xf32>
    %103 = arith.truncf %102 : vector<32x256xf32> to vector<32x256xbf16>
    %c0_53 = arith.constant 0 : index
    %c0_54 = arith.constant 0 : index
    %104 = vector.load %arg8[%c0_53, %c0_54] : memref<8x32xbf16, #tpu.memory_space<vmem>>, vector<8x32xbf16>
    %cst_55 = arith.constant dense<0.000000e+00> : vector<8x256xf32>
    %105 = tpu.matmul %104, %103, %cst_55 {dimension_numbers = #tpu.dot_dimension_numbers<[1], [0], [0], [1], [0, 0, 1, 1], [], []>} : vector<8x32xbf16>, vector<32x256xbf16>, vector<8x256xf32> -> vector<8x256xf32>
    %106 = arith.addf %69, %105 : vector<8x256xf32>
    %c0_56 = arith.constant 0 : index
    %c0_57 = arith.constant 0 : index
    %107 = vector.load %arg9[%c0_56, %c0_57] : memref<8x1xf32, #tpu.memory_space<vmem>>, vector<8x1xf32>
    %108 = vector.broadcast %107 : vector<8x1xf32> to vector<8x256xf32>
    %109 = arith.addf %106, %108 : vector<8x256xf32>
    %110 = vector.extract_strided_slice %109 {offsets = [0, 0], sizes = [4, 256], strides = [1, 1]} : vector<8x256xf32> to vector<4x256xf32>
    %111 = vector.extract_strided_slice %109 {offsets = [4, 0], sizes = [4, 256], strides = [1, 1]} : vector<8x256xf32> to vector<4x256xf32>
    %c0_58 = arith.constant 0 : index
    %c0_59 = arith.constant 0 : index
    %112 = vector.load %arg1[%c0_58, %c0_59] : memref<4x256xf32, #tpu.memory_space<vmem>>, vector<4x256xf32>
    %113 = math.exp %110 : vector<4x256xf32>
    %114 = arith.mulf %112, %113 : vector<4x256xf32>
    %115 = arith.addf %114, %111 : vector<4x256xf32>
    %c0_60 = arith.constant 0 : index
    %c0_61 = arith.constant 0 : index
    %116 = vector.load %arg10[%c0_60, %c0_61] : memref<8x256xf32, #tpu.memory_space<vmem>>, vector<4x256xf32>
    tpu.vector_store %arg10[%c0_60, %c0_61], %115 {strides = array<i32>} : memref<8x256xf32, #tpu.memory_space<vmem>>, vector<4x256xf32>,
    %c4 = arith.constant 4 : index
    %c0_62 = arith.constant 0 : index
    %117 = vector.load %arg10[%c4, %c0_62] : memref<8x256xf32, #tpu.memory_space<vmem>>, vector<4x256xf32>
    tpu.vector_store %arg10[%c4, %c0_62], %110 {strides = array<i32>} : memref<8x256xf32, #tpu.memory_space<vmem>>, vector<4x256xf32>,
    return
  }
}

</mosaic_0001>

<llo_original>
// kernel: tpu_custom_call.1
$region0: #{tpu_custom_call.1}
  #allocation0 [shape = 'u32[]', space=smem, size = 0x4, offset = 0x4, fixed_abs, tag = 'smem constant byte address 0x4 - core index']
  #allocation1 [shape = 'u32[144,128]{1,0:T(1,128)}', space=vmem, size = 0x12000, scoped, tag = 'internal scratch']
  #allocation2 [shape = 'bf16[96,256]{1,0:T(16,128)(2,1)}', space=vmem, size = 0xc000, scoped, tag = 'scratch operand']
  %s0 = inlined_call_operand.vmem [shape: bf16[8,256], index: 0, kind: input, shape index: {}]
  %s1 = inlined_call_operand.vmem [shape: f32[4,256], index: 1, kind: input, shape index: {}]
  %s2 = inlined_call_operand.vmem [shape: bf16[16,256], index: 2, kind: input, shape index: {}]
  %s3 = inlined_call_operand.vmem [shape: bf16[32,8], index: 3, kind: input, shape index: {}]
  %s4 = inlined_call_operand.vmem [shape: bf16[128,16], index: 4, kind: input, shape index: {}]
  %s5 = inlined_call_operand.vmem [shape: bf16[2,64,96], index: 5, kind: input, shape index: {}]
  %s6 = inlined_call_operand.vmem [shape: bf16[1,40,32], index: 6, kind: input, shape index: {}]
  %s7 = inlined_call_operand.vmem [shape: f32[1,32,1], index: 7, kind: input, shape index: {}]
  %s8 = inlined_call_operand.vmem [shape: bf16[8,32], index: 8, kind: input, shape index: {}]
  %s9 = inlined_call_operand.vmem [shape: f32[8,1], index: 9, kind: input, shape index: {}]
  %s10 = inlined_call_operand.hbm [shape: f32[8,256], index: 10, kind: output, shape index: {}]
  %s11 = sld [smem:[#allocation0]]
  $region50: #{tpu_custom_call.1} parent=0
    _
  %s13 = ssub.s32 1, %s11
  %s14 = scalar_select 0, %s13, %s11
  $region1: #{tpu_custom_call.1} parent=0
    #allocation3 [shape = 'u8[8192]{0}', space=vmem, size = 0x2000, scoped, tag = 'output window, operand 0, single buffered']
    #allocation4 [shape = 's32[1]{0}', space=sflag, size = 0x4, scoped, tag = 'scoped memory for tpu_custom_call.1']
    %15 = vsyncpa [#allocation4], 0
    // Predicated region
    $region2: #{tpu_custom_call.1} parent=1 // pred_check
      _
    $region3: #{tpu_custom_call.1} parent=1 // pred_check_branch
      %17 = sbr.rel (0) target = $region5
    $region4: #{tpu_custom_call.1} parent=1 // pred_region
      _
    $region5: #{tpu_custom_call.1} parent=1 // pred_fallthru
      _
    // Predicated region
    $region6: #{tpu_custom_call.1} parent=1 // pred_check
      _
    $region7: #{tpu_custom_call.1} parent=1 // pred_check_branch
      %19 = sbr.rel (0) target = $region9
    $region8: #{tpu_custom_call.1} parent=1 // pred_region
      _
    $region9: #{tpu_custom_call.1} parent=1 // pred_fallthru
      _
    // Predicated region
    $region10: #{tpu_custom_call.1} parent=1 // pred_check
      _
    $region11: #{tpu_custom_call.1} parent=1 // pred_check_branch
      %21 = sbr.rel (0) target = $region13
    $region12: #{tpu_custom_call.1} parent=1 // pred_region
      _
    $region13: #{tpu_custom_call.1} parent=1 // pred_fallthru
      _
    // Predicated region
    $region14: #{tpu_custom_call.1} parent=1 // pred_check
      _
    $region15: #{tpu_custom_call.1} parent=1 // pred_check_branch
      %23 = sbr.rel (0) target = $region17
    $region16: #{tpu_custom_call.1} parent=1 // pred_region
      _
    $region17: #{tpu_custom_call.1} parent=1 // pred_fallthru
      _
    // Predicated region
    $region18: #{tpu_custom_call.1} parent=1 // pred_check
      _
    $region19: #{tpu_custom_call.1} parent=1 // pred_check_branch
      %25 = sbr.rel (0) target = $region21
    $region20: #{tpu_custom_call.1} parent=1 // pred_region
      _
    $region21: #{tpu_custom_call.1} parent=1 // pred_fallthru
      _
    // Predicated region
    $region22: #{tpu_custom_call.1} parent=1 // pred_check
      _
    $region23: #{tpu_custom_call.1} parent=1 // pred_check_branch
      %27 = sbr.rel (0) target = $region25
    $region24: #{tpu_custom_call.1} parent=1 // pred_region
      _
    $region25: #{tpu_custom_call.1} parent=1 // pred_fallthru
      _
    // Predicated region
    $region26: #{tpu_custom_call.1} parent=1 // pred_check
      _
    $region27: #{tpu_custom_call.1} parent=1 // pred_check_branch
      %29 = sbr.rel (0) target = $region29
    $region28: #{tpu_custom_call.1} parent=1 // pred_region
      _
    $region29: #{tpu_custom_call.1} parent=1 // pred_fallthru
      _
    // Predicated region
    $region30: #{tpu_custom_call.1} parent=1 // pred_check
      _
    $region31: #{tpu_custom_call.1} parent=1 // pred_check_branch
      %31 = sbr.rel (0) target = $region33
    $region32: #{tpu_custom_call.1} parent=1 // pred_region
      _
    $region33: #{tpu_custom_call.1} parent=1 // pred_fallthru
      _
    // Predicated region
    $region34: #{tpu_custom_call.1} parent=1 // pred_check
      _
    $region35: #{tpu_custom_call.1} parent=1 // pred_check_branch
      %33 = sbr.rel (0) target = $region37
    $region36: #{tpu_custom_call.1} parent=1 // pred_region
      _
    $region37: #{tpu_custom_call.1} parent=1 // pred_fallthru
      _
    // Predicated region
    $region38: #{tpu_custom_call.1} parent=1 // pred_check
      _
    $region39: #{tpu_custom_call.1} parent=1 // pred_check_branch
      %35 = sbr.rel (0) target = $region41
    $region40: #{tpu_custom_call.1} parent=1 // pred_region
      _
    $region41: #{tpu_custom_call.1} parent=1 // pred_fallthru
      _
    %v37 = vld [vmem:[%s4] sm:$0xf]
    %v38 = vld [vmem:[%s4 + $0x4] sm:$0xf]
    %v39 = vld [vmem:[%s4 + $0x8] sm:$0xf]
    %v40 = vld [vmem:[%s4 + $0xc] sm:$0xf]
    %v41 = vld [vmem:[%s4 + $0x10] sm:$0xf]
    %v42 = vld [vmem:[%s4 + $0x14] sm:$0xf]
    %v43 = vld [vmem:[%s4 + $0x18] sm:$0xf]
    %v44 = vld [vmem:[%s4 + $0x1c] sm:$0xf]
    %v45 = vld [vmem:[%s4 + $0x20] sm:$0xf]
    %v46 = vld [vmem:[%s4 + $0x24] sm:$0xf]
    %v47 = vld [vmem:[%s4 + $0x28] sm:$0xf]
    %v48 = vld [vmem:[%s4 + $0x2c] sm:$0xf]
    %v49 = vld [vmem:[%s4 + $0x30] sm:$0xf]
    %v50 = vld [vmem:[%s4 + $0x34] sm:$0xf]
    %v51 = vld [vmem:[%s4 + $0x38] sm:$0xf]
    %v52 = vld [vmem:[%s4 + $0x3c] sm:$0xf]
    %v53 = vld [vmem:[%s2] sm:$0xff]
    %v54 = vld [vmem:[%s2 + $0x8] sm:$0xff]
    %v71 = vunpack.c.l.b16 %v37
    %v72 = vunpack.c.l.b16 %v38
    %v73 = vunpack.c.l.b16 %v39
    %v74 = vunpack.c.l.b16 %v40
    %v75 = vunpack.c.l.b16 %v41
    %v76 = vunpack.c.l.b16 %v42
    %v77 = vunpack.c.l.b16 %v43
    %v78 = vunpack.c.l.b16 %v44
    %v79 = vunpack.c.l.b16 %v45
    %v80 = vunpack.c.l.b16 %v46
    %v81 = vunpack.c.l.b16 %v47
    %v82 = vunpack.c.l.b16 %v48
    %v83 = vunpack.c.l.b16 %v49
    %v84 = vunpack.c.l.b16 %v50
    %v85 = vunpack.c.l.b16 %v51
    %v86 = vunpack.c.l.b16 %v52
    %v87 = vpack.c.b16 %v72, %v71
    %v88 = vpack.c.b16 %v74, %v73
    %v89 = vpack.c.b16 %v76, %v75
    %v90 = vpack.c.b16 %v78, %v77
    %v91 = vpack.c.b16 %v80, %v79
    %v92 = vpack.c.b16 %v82, %v81
    %v93 = vpack.c.b16 %v84, %v83
    %v94 = vpack.c.b16 %v86, %v85
    %v97 = vunpack.c.l.b16 %v53
    %v98 = vunpack.c.h.b16 %v53
    %v99 = vunpack.c.l.b16 %v54
    %v100 = vunpack.c.h.b16 %v54
    %v101 = vpack.c.b16 %v99, %v97
    %v102 = vpack.c.b16 %v100, %v98
    %vm105 = vcmask 130048
    %v107 = vsel %vm105, %v87, 0
    %v110 = vsel %vm105, %v88, 0
    %v113 = vsel %vm105, %v89, 0
    %v116 = vsel %vm105, %v90, 0
    %v119 = vsel %vm105, %v91, 0
    %v122 = vsel %vm105, %v92, 0
    %v125 = vsel %vm105, %v93, 0
    %v128 = vsel %vm105, %v94, 0
    %130 = vmatprep.subr.bf16.mxu0 %v102
    %131 = vmatpush1.bf16.msra.mxu0 %v101
    %132 = vmatprep.subr.bf16.mxu0 0
    %133 = vmatpush1.bf16.msra.mxu0 0
    %134 = vmatprep.subr.bf16.mxu0 0
    %135 = vmatpush1.bf16.msra.mxu0 0
    %136 = vmatprep.subr.bf16.mxu0 0
    %137 = vmatpush1.bf16.msra.mxu0 0
    %138 = vmatprep.subr.bf16.mxu0 0
    %139 = vmatpush1.bf16.msra.mxu0 0
    %140 = vmatprep.subr.bf16.mxu0 0
    %141 = vmatpush1.bf16.msra.mxu0 0
    %142 = vmatprep.subr.bf16.mxu0 0
    %143 = vmatpush1.bf16.msra.mxu0 0
    %144 = vmatprep.subr.bf16.mxu0 0
    %145 = vmatpush1.bf16.msra.mxu0 0
    %146 = vmatprep.subr.bf16.mxu0 0
    %147 = vmatpush1.bf16.msra.mxu0 0
    %148 = vmatprep.subr.bf16.mxu0 0
    %149 = vmatpush1.bf16.msra.mxu0 0
    %150 = vmatprep.subr.bf16.mxu0 0
    %151 = vmatpush1.bf16.msra.mxu0 0
    %152 = vmatprep.subr.bf16.mxu0 0
    %153 = vmatpush1.bf16.msra.mxu0 0
    %154 = vmatprep.subr.bf16.mxu0 0
    %155 = vmatpush1.bf16.msra.mxu0 0
    %156 = vmatprep.subr.bf16.mxu0 0
    %157 = vmatpush1.bf16.msra.mxu0 0
    %158 = vmatprep.subr.bf16.mxu0 0
    %159 = vmatpush1.bf16.msra.mxu0 0
    %160 = vmatprep.subr.bf16.mxu0 0
    %161 = vmatpush1.bf16.msra.mxu0 0
    %162 = vmatprep.mubr.bf16.mxu0 0
    %163 = vmatmul.mubr.bf16.gmra.mrb[0].mxu0 %v107
    %v164 = vpop.f32.mrb[0].mxu0
    %v165 = vadd.f32 0.0, %v164
    %v166 = vpop.f32.mrb[0].mxu0
    %v167 = vadd.f32 0.0, %v166
    %v168 = vpop.f32.mrb[0].mxu0
    %v169 = vadd.f32 0.0, %v168
    %v170 = vpop.f32.mrb[0].mxu0
    %v171 = vadd.f32 0.0, %v170
    %172 = vmatprep.mubr.bf16.mxu0 0
    %173 = vmatmul.mubr.bf16.gmra.mrb[0].mxu0 %v110
    %v174 = vpop.f32.mrb[0].mxu0
    %v175 = vadd.f32 0.0, %v174
    %v176 = vpop.f32.mrb[0].mxu0
    %v177 = vadd.f32 0.0, %v176
    %v178 = vpop.f32.mrb[0].mxu0
    %v179 = vadd.f32 0.0, %v178
    %v180 = vpop.f32.mrb[0].mxu0
    %v181 = vadd.f32 0.0, %v180
    %182 = vmatprep.mubr.bf16.mxu0 0
    %183 = vmatmul.mubr.bf16.gmra.mrb[0].mxu0 %v113
    %v184 = vpop.f32.mrb[0].mxu0
    %v185 = vadd.f32 0.0, %v184
    %v186 = vpop.f32.mrb[0].mxu0
    %v187 = vadd.f32 0.0, %v186
    %v188 = vpop.f32.mrb[0].mxu0
    %v189 = vadd.f32 0.0, %v188
    %v190 = vpop.f32.mrb[0].mxu0
    %v191 = vadd.f32 0.0, %v190
    %192 = vmatprep.mubr.bf16.mxu0 0
    %193 = vmatmul.mubr.bf16.gmra.mrb[0].mxu0 %v116
    %v194 = vpop.f32.mrb[0].mxu0
    %v195 = vadd.f32 0.0, %v194
    %v196 = vpop.f32.mrb[0].mxu0
    %v197 = vadd.f32 0.0, %v196
    %v198 = vpop.f32.mrb[0].mxu0
    %v199 = vadd.f32 0.0, %v198
    %v200 = vpop.f32.mrb[0].mxu0
    %v201 = vadd.f32 0.0, %v200
    %202 = vmatprep.mubr.bf16.mxu0 0
    %203 = vmatmul.mubr.bf16.gmra.mrb[0].mxu0 %v119
    %v204 = vpop.f32.mrb[0].mxu0
    %v205 = vadd.f32 0.0, %v204
    %v206 = vpop.f32.mrb[0].mxu0
    %v207 = vadd.f32 0.0, %v206
    %v208 = vpop.f32.mrb[0].mxu0
    %v209 = vadd.f32 0.0, %v208
    %v210 = vpop.f32.mrb[0].mxu0
    %v211 = vadd.f32 0.0, %v210
    %212 = vmatprep.mubr.bf16.mxu0 0
    %213 = vmatmul.mubr.bf16.gmra.mrb[0].mxu0 %v122
    %v214 = vpop.f32.mrb[0].mxu0
    %v215 = vadd.f32 0.0, %v214
    %v216 = vpop.f32.mrb[0].mxu0
    %v217 = vadd.f32 0.0, %v216
    %v218 = vpop.f32.mrb[0].mxu0
    %v219 = vadd.f32 0.0, %v218
    %v220 = vpop.f32.mrb[0].mxu0
    %v221 = vadd.f32 0.0, %v220
    %222 = vmatprep.mubr.bf16.mxu0 0
    %223 = vmatmul.mubr.bf16.gmra.mrb[0].mxu0 %v125
    %v224 = vpop.f32.mrb[0].mxu0
    %v225 = vadd.f32 0.0, %v224
    %v226 = vpop.f32.mrb[0].mxu0
    %v227 = vadd.f32 0.0, %v226
    %v228 = vpop.f32.mrb[0].mxu0
    %v229 = vadd.f32 0.0, %v228
    %v230 = vpop.f32.mrb[0].mxu0
    %v231 = vadd.f32 0.0, %v230
    %232 = vmatprep.mubr.bf16.mxu0 0
    %233 = vmatmul.mubr.bf16.gmra.mrb[0].mxu0 %v128
    %v234 = vpop.f32.mrb[0].mxu0
    %v235 = vadd.f32 0.0, %v234
    %v236 = vpop.f32.mrb[0].mxu0
    %v237 = vadd.f32 0.0, %v236
    %v238 = vpop.f32.mrb[0].mxu0
    %v239 = vadd.f32 0.0, %v238
    %v240 = vpop.f32.mrb[0].mxu0
    %v241 = vadd.f32 0.0, %v240
    %242 = vdwg.mxu0
    %v243 = vld [vmem:[%s3] sm:$0xf]
    %v244 = vld [vmem:[%s3 + $0x4] sm:$0xf]
    %v245 = vld [vmem:[%s3 + $0x8] sm:$0xf]
    %v246 = vld [vmem:[%s3 + $0xc] sm:$0xf]
    %v247 = vld [vmem:[%s0] sm:$0xff]
    %v252 = vunpack.c.l.b16 %v243
    %v253 = vunpack.c.l.b16 %v244
    %v254 = vunpack.c.l.b16 %v245
    %v255 = vunpack.c.l.b16 %v246
    %v256 = vpack.c.b16 %v253, %v252
    %v257 = vpack.c.b16 %v255, %v254
    %v259 = vunpack.c.l.b16 %v247
    %v260 = vunpack.c.h.b16 %v247
    %v261 = vpack.c.b16 %v259, %v259
    %v262 = vpack.c.b16 %v260, %v260
    %vm263 = vcmask 64512
    %v265 = vsel %vm263, %v256, 0
    %v268 = vsel %vm263, %v257, 0
    %vm270 = vcmask 1043456
    %v272 = vsel %vm270, %v261, 0
    %v275 = vsel %vm270, %v262, 0
    %277 = vmatprep.subr.bf16.mxu0 %v275
    %278 = vmatpush1.bf16.msra.mxu0 %v272
    %279 = vmatprep.subr.bf16.mxu0 0
    %280 = vmatpush1.bf16.msra.mxu0 0
    %281 = vmatprep.subr.bf16.mxu0 0
    %282 = vmatpush1.bf16.msra.mxu0 0
    %283 = vmatprep.subr.bf16.mxu0 0
    %284 = vmatpush1.bf16.msra.mxu0 0
    %285 = vmatprep.subr.bf16.mxu0 0
    %286 = vmatpush1.bf16.msra.mxu0 0
    %287 = vmatprep.subr.bf16.mxu0 0
    %288 = vmatpush1.bf16.msra.mxu0 0
    %289 = vmatprep.subr.bf16.mxu0 0
    %290 = vmatpush1.bf16.msra.mxu0 0
    %291 = vmatprep.subr.bf16.mxu0 0
    %292 = vmatpush1.bf16.msra.mxu0 0
    %293 = vmatprep.subr.bf16.mxu0 0
    %294 = vmatpush1.bf16.msra.mxu0 0
    %295 = vmatprep.subr.bf16.mxu0 0
    %296 = vmatpush1.bf16.msra.mxu0 0
    %297 = vmatprep.subr.bf16.mxu0 0
    %298 = vmatpush1.bf16.msra.mxu0 0
    %299 = vmatprep.subr.bf16.mxu0 0
    %300 = vmatpush1.bf16.msra.mxu0 0
    %301 = vmatprep.subr.bf16.mxu0 0
    %302 = vmatpush1.bf16.msra.mxu0 0
    %303 = vmatprep.subr.bf16.mxu0 0
    %304 = vmatpush1.bf16.msra.mxu0 0
    %305 = vmatprep.subr.bf16.mxu0 0
    %306 = vmatpush1.bf16.msra.mxu0 0
    %307 = vmatprep.subr.bf16.mxu0 0
    %308 = vmatpush1.bf16.msra.mxu0 0
    %309 = vmatprep.mubr.bf16.mxu0 0
    %310 = vmatmul.mubr.bf16.gmra.mrb[0].mxu0 %v265
    %v311 = vpop.f32.mrb[0].mxu0
    %v312 = vadd.f32 0.0, %v311
    %v313 = vpop.f32.mrb[0].mxu0
    %v314 = vadd.f32 0.0, %v313
    %v315 = vpop.f32.mrb[0].mxu0
    %v316 = vadd.f32 0.0, %v315
    %v317 = vpop.f32.mrb[0].mxu0
    %v318 = vadd.f32 0.0, %v317
    %319 = vmatprep.mubr.bf16.mxu0 0
    %320 = vmatmul.mubr.bf16.gmra.mrb[0].mxu0 %v268
    %v321 = vpop.f32.mrb[0].mxu0
    %v322 = vadd.f32 0.0, %v321
    %v323 = vpop.f32.mrb[0].mxu0
    %v324 = vadd.f32 0.0, %v323
    %v325 = vpop.f32.mrb[0].mxu0
    %v326 = vadd.f32 0.0, %v325
    %v327 = vpop.f32.mrb[0].mxu0
    %v328 = vadd.f32 0.0, %v327
    %329 = vdwg.mxu0
    %v330 = vtanh.pop %v312
    %v331 = vtanh.pop %v314
    %v332 = vtanh.pop %v316
    %v333 = vtanh.pop %v318
    %v334 = vtanh.pop %v322
    %v335 = vtanh.pop %v324
    %v336 = vtanh.pop %v326
    %v337 = vtanh.pop %v328
    %v338 = vlaneseq
    %v339 = vand.u32 %v338, 127
    %v340 = vadd.s32 %v339, 128
    %vm341 = vcmp.lt.s32.totalorder %v339, 0
    %v342 = vsub.s32 0, %v339
    %v343 = vsel %vm341, %v342, %v339
    %v344 = vshrl.u32 %v343, 7
    %v345 = vand.u32 %v343, 127
    %v346 = vsub.s32 0, %v345
    %v347 = vsel %vm341, %v346, %v345
    %vm348 = vcmp.lt.s32.totalorder %v340, 0
    %v349 = vsub.s32 0, %v340
    %v350 = vsel %vm348, %v349, %v340
    %v351 = vshrl.u32 %v350, 7
    %v352 = vand.u32 %v350, 127
    %v353 = vsub.s32 0, %v352
    %v354 = vsel %vm348, %v353, %v352
    %vm355 = vcmp.ne.s32.totalorder %v347, 0
    %vm356 = vcmp.ne.s32.totalorder %v354, 0
    %vm357 = vcmp.lt.s32.totalorder %v347, 0
    %vm358 = vcmp.lt.s32.totalorder %v354, 0
    %vm359 = vmand %vm357, %vm355
    %vm360 = vmand %vm358, %vm356
    %v361 = vadd.s32 %v347, 128
    %v362 = vadd.s32 %v354, 128
    %v363 = vsel %vm359, %v361, %v347
    %v364 = vsel %vm360, %v362, %v354
    %vm365 = vcmp.lt.s32.totalorder %v363, 1
    %vm366 = vcmp.lt.s32.totalorder %v364, 1
    %367 = vrot.lane.b32.xlu0 %v330, 1
    %v368 = vpop.permute.xlu0 %367
    %369 = vrot.lane.b32.xlu0 %v332, 1
    %v370 = vpop.permute.xlu0 %369
    %371 = vrot.lane.b32.xlu0 %v334, 1
    %v372 = vpop.permute.xlu0 %371
    %373 = vrot.lane.b32.xlu0 %v336, 1
    %v374 = vpop.permute.xlu0 %373
    %375 = vrot.lane.b32.xlu0 %v331, 1
    %v376 = vpop.permute.xlu0 %375
    %377 = vrot.lane.b32.xlu0 %v333, 1
    %v378 = vpop.permute.xlu0 %377
    %379 = vrot.lane.b32.xlu0 %v335, 1
    %v380 = vpop.permute.xlu0 %379
    %381 = vrot.lane.b32.xlu0 %v337, 1
    %v382 = vpop.permute.xlu0 %381
    %vm383 = vcmp.lt.s32.totalorder %v339, 1
    %v384 = vsel %vm383, %v368, %v376
    %v385 = vsel %vm383, %v370, %v378
    %v386 = vsel %vm383, %v372, %v380
    %v387 = vsel %vm383, %v374, %v382
    %v388 = vsel %vm383, %v376, %v368
    %v389 = vsel %vm383, %v378, %v370
    %v390 = vsel %vm383, %v380, %v372
    %v391 = vsel %vm383, %v382, %v374
    %v392 = vsel %vm365, 0.0, %v388
    %v393 = vsel %vm366, 0.0, %v384
    %v394 = vsel %vm365, 0.0, %v389
    %v395 = vsel %vm366, 0.0, %v385
    %v396 = vsel %vm365, 0.0, %v390
    %v397 = vsel %vm366, 0.0, %v386
    %v398 = vsel %vm365, 0.0, %v391
    %v399 = vsel %vm366, 0.0, %v387
    %vm400 = vcmp.ge.s32.totalorder %v363, 127
    %vm401 = vcmp.ge.s32.totalorder %v364, 127
    %402 = vrot.lane.b32.xlu0 %v330, 127
    %v403 = vpop.permute.xlu0 %402
    %404 = vrot.lane.b32.xlu0 %v332, 127
    %v405 = vpop.permute.xlu0 %404
    %406 = vrot.lane.b32.xlu0 %v334, 127
    %v407 = vpop.permute.xlu0 %406
    %408 = vrot.lane.b32.xlu0 %v336, 127
    %v409 = vpop.permute.xlu0 %408
    %410 = vrot.lane.b32.xlu0 %v331, 127
    %v411 = vpop.permute.xlu0 %410
    %412 = vrot.lane.b32.xlu0 %v333, 127
    %v413 = vpop.permute.xlu0 %412
    %414 = vrot.lane.b32.xlu0 %v335, 127
    %v415 = vpop.permute.xlu0 %414
    %416 = vrot.lane.b32.xlu0 %v337, 127
    %v417 = vpop.permute.xlu0 %416
    %vm418 = vcmp.lt.s32.totalorder %v339, 127
    %v419 = vsel %vm418, %v403, %v411
    %v420 = vsel %vm418, %v405, %v413
    %v421 = vsel %vm418, %v407, %v415
    %v422 = vsel %vm418, %v409, %v417
    %v423 = vsel %vm418, %v411, %v403
    %v424 = vsel %vm418, %v413, %v405
    %v425 = vsel %vm418, %v415, %v407
    %v426 = vsel %vm418, %v417, %v409
    %v427 = vsel %vm400, 0.0, %v419
    %v428 = vsel %vm401, 0.0, %v423
    %v429 = vsel %vm400, 0.0, %v420
    %v430 = vsel %vm401, 0.0, %v424
    %v431 = vsel %vm400, 0.0, %v421
    %v432 = vsel %vm401, 0.0, %v425
    %v433 = vsel %vm400, 0.0, %v422
    %v434 = vsel %vm401, 0.0, %v426
    %v435 = vpack.c.bf16 %v394, %v392
    %v436 = vpack.c.bf16 %v395, %v393
    %v437 = vpack.c.bf16 %v398, %v396
    %v438 = vpack.c.bf16 %v399, %v397
    %439 = vst [vmem:[#allocation2] sm:$0xff] %v435
    %440 = vst [vmem:[#allocation2 + $0x8] sm:$0xff] %v436
    %441 = vst [vmem:[#allocation2 + $0x10] sm:$0xff] %v437
    %442 = vst [vmem:[#allocation2 + $0x18] sm:$0xff] %v438
    %v443 = vpack.c.bf16 %v332, %v330
    %v444 = vpack.c.bf16 %v333, %v331
    %v445 = vpack.c.bf16 %v336, %v334
    %v446 = vpack.c.bf16 %v337, %v335
    %447 = vst [vmem:[#allocation2 + $0x20] sm:$0xff] %v443
    %448 = vst [vmem:[#allocation2 + $0x28] sm:$0xff] %v444
    %449 = vst [vmem:[#allocation2 + $0x30] sm:$0xff] %v445
    %450 = vst [vmem:[#allocation2 + $0x38] sm:$0xff] %v446
    %v451 = vpack.c.bf16 %v429, %v427
    %v452 = vpack.c.bf16 %v430, %v428
    %v453 = vpack.c.bf16 %v433, %v431
    %v454 = vpack.c.bf16 %v434, %v432
    %455 = vst [vmem:[#allocation2 + $0x40] sm:$0xff] %v451
    %456 = vst [vmem:[#allocation2 + $0x48] sm:$0xff] %v452
    %457 = vst [vmem:[#allocation2 + $0x50] sm:$0xff] %v453
    %458 = vst [vmem:[#allocation2 + $0x58] sm:$0xff] %v454
    %v459 = vld [vmem:[%s5] sm:$0xf]
    %v460 = vld [vmem:[%s5 + $0x4] sm:$0xf]
    %v461 = vld [vmem:[%s5 + $0x8] sm:$0xf]
    %v462 = vld [vmem:[%s5 + $0xc] sm:$0xf]
    %v463 = vld [vmem:[%s5 + $0x10] sm:$0xf]
    %v464 = vld [vmem:[%s5 + $0x14] sm:$0xf]
    %v465 = vld [vmem:[%s5 + $0x18] sm:$0xf]
    %v466 = vld [vmem:[%s5 + $0x1c] sm:$0xf]
    %v467 = vld [vmem:[#allocation2] sm:$0xff]
    %v468 = vld [vmem:[#allocation2 + $0x8] sm:$0xff]
    %v469 = vld [vmem:[#allocation2 + $0x10] sm:$0xff]
    %v470 = vld [vmem:[#allocation2 + $0x18] sm:$0xff]
    %v471 = vld [vmem:[#allocation2 + $0x20] sm:$0xff]
    %v472 = vld [vmem:[#allocation2 + $0x28] sm:$0xff]
    %v473 = vld [vmem:[#allocation2 + $0x30] sm:$0xff]
    %v474 = vld [vmem:[#allocation2 + $0x38] sm:$0xff]
    %v475 = vld [vmem:[#allocation2 + $0x40] sm:$0xff]
    %v476 = vld [vmem:[#allocation2 + $0x48] sm:$0xff]
    %v477 = vld [vmem:[#allocation2 + $0x50] sm:$0xff]
    %v478 = vld [vmem:[#allocation2 + $0x58] sm:$0xff]
    %v487 = vunpack.c.l.b16 %v459
    %v488 = vunpack.c.l.b16 %v460
    %v489 = vunpack.c.l.b16 %v461
    %v490 = vunpack.c.l.b16 %v462
    %v491 = vunpack.c.l.b16 %v463
    %v492 = vunpack.c.l.b16 %v464
    %v493 = vunpack.c.l.b16 %v465
    %v494 = vunpack.c.l.b16 %v466
    %v495 = vpack.c.b16 %v488, %v487
    %v496 = vpack.c.b16 %v490, %v489
    %v497 = vpack.c.b16 %v492, %v491
    %v498 = vpack.c.b16 %v494, %v493
    %vm499 = vcmask 785408
    %v501 = vsel %vm499, %v495, 0
    %v504 = vsel %vm499, %v496, 0
    %v507 = vsel %vm499, %v497, 0
    %v510 = vsel %vm499, %v498, 0
    %512 = vmatprep.subr.bf16.mxu0 %v468
    %513 = vmatpush1.bf16.msra.mxu0 %v467
    %514 = vmatprep.subr.bf16.mxu0 %v470
    %515 = vmatpush1.bf16.msra.mxu0 %v469
    %516 = vmatprep.subr.bf16.mxu0 %v472
    %517 = vmatpush1.bf16.msra.mxu0 %v471
    %518 = vmatprep.subr.bf16.mxu0 %v474
    %519 = vmatpush1.bf16.msra.mxu0 %v473
    %520 = vmatprep.subr.bf16.mxu0 %v476
    %521 = vmatpush1.bf16.msra.mxu0 %v475
    %522 = vmatprep.subr.bf16.mxu0 %v478
    %523 = vmatpush1.bf16.msra.mxu0 %v477
    %524 = vmatprep.subr.bf16.mxu0 0
    %525 = vmatpush1.bf16.msra.mxu0 0
    %526 = vmatprep.subr.bf16.mxu0 0
    %527 = vmatpush1.bf16.msra.mxu0 0
    %528 = vmatprep.subr.bf16.mxu0 0
    %529 = vmatpush1.bf16.msra.mxu0 0
    %530 = vmatprep.subr.bf16.mxu0 0
    %531 = vmatpush1.bf16.msra.mxu0 0
    %532 = vmatprep.subr.bf16.mxu0 0
    %533 = vmatpush1.bf16.msra.mxu0 0
    %534 = vmatprep.subr.bf16.mxu0 0
    %535 = vmatpush1.bf16.msra.mxu0 0
    %536 = vmatprep.subr.bf16.mxu0 0
    %537 = vmatpush1.bf16.msra.mxu0 0
    %538 = vmatprep.subr.bf16.mxu0 0
    %539 = vmatpush1.bf16.msra.mxu0 0
    %540 = vmatprep.subr.bf16.mxu0 0
    %541 = vmatpush1.bf16.msra.mxu0 0
    %542 = vmatprep.subr.bf16.mxu0 0
    %543 = vmatpush1.bf16.msra.mxu0 0
    %544 = vmatprep.mubr.bf16.mxu0 0
    %545 = vmatmul.mubr.bf16.gmra.mrb[0].mxu0 %v501
    %v546 = vpop.f32.mrb[0].mxu0
    %v547 = vadd.f32 %v165, %v546
    %v548 = vpop.f32.mrb[0].mxu0
    %v549 = vadd.f32 %v167, %v548
    %v550 = vpop.f32.mrb[0].mxu0
    %v551 = vadd.f32 %v169, %v550
    %v552 = vpop.f32.mrb[0].mxu0
    %v553 = vadd.f32 %v171, %v552
    %554 = vmatprep.mubr.bf16.mxu0 0
    %555 = vmatmul.mubr.bf16.gmra.mrb[0].mxu0 %v504
    %v556 = vpop.f32.mrb[0].mxu0
    %v557 = vadd.f32 %v175, %v556
    %v558 = vpop.f32.mrb[0].mxu0
    %v559 = vadd.f32 %v177, %v558
    %v560 = vpop.f32.mrb[0].mxu0
    %v561 = vadd.f32 %v179, %v560
    %v562 = vpop.f32.mrb[0].mxu0
    %v563 = vadd.f32 %v181, %v562
    %564 = vmatprep.mubr.bf16.mxu0 0
    %565 = vmatmul.mubr.bf16.gmra.mrb[0].mxu0 %v507
    %v566 = vpop.f32.mrb[0].mxu0
    %v567 = vadd.f32 %v185, %v566
    %v568 = vpop.f32.mrb[0].mxu0
    %v569 = vadd.f32 %v187, %v568
    %v570 = vpop.f32.mrb[0].mxu0
    %v571 = vadd.f32 %v189, %v570
    %v572 = vpop.f32.mrb[0].mxu0
    %v573 = vadd.f32 %v191, %v572
    %574 = vmatprep.mubr.bf16.mxu0 0
    %575 = vmatmul.mubr.bf16.gmra.mrb[0].mxu0 %v510
    %v576 = vpop.f32.mrb[0].mxu0
    %v577 = vadd.f32 %v195, %v576
    %v578 = vpop.f32.mrb[0].mxu0
    %v579 = vadd.f32 %v197, %v578
    %v580 = vpop.f32.mrb[0].mxu0
    %v581 = vadd.f32 %v199, %v580
    %v582 = vpop.f32.mrb[0].mxu0
    %v583 = vadd.f32 %v201, %v582
    %584 = vdwg.mxu0
    %v585 = vtanh.pop %v547
    %v586 = vtanh.pop %v549
    %v587 = vtanh.pop %v551
    %v588 = vtanh.pop %v553
    %v589 = vtanh.pop %v557
    %v590 = vtanh.pop %v559
    %v591 = vtanh.pop %v561
    %v592 = vtanh.pop %v563
    %v593 = vmul.f32 %v567, 0.5
    %v594 = vmul.f32 %v569, 0.5
    %v595 = vmul.f32 %v571, 0.5
    %v596 = vmul.f32 %v573, 0.5
    %v597 = vmul.f32 %v577, 0.5
    %v598 = vmul.f32 %v579, 0.5
    %v599 = vmul.f32 %v581, 0.5
    %v600 = vmul.f32 %v583, 0.5
    %v601 = vtanh.pop %v593
    %v602 = vtanh.pop %v594
    %v603 = vtanh.pop %v595
    %v604 = vtanh.pop %v596
    %v605 = vtanh.pop %v597
    %v606 = vtanh.pop %v598
    %v607 = vtanh.pop %v599
    %v608 = vtanh.pop %v600
    %v609 = vmul.f32 %v601, 0.5
    %v610 = vmul.f32 %v602, 0.5
    %v611 = vmul.f32 %v603, 0.5
    %v612 = vmul.f32 %v604, 0.5
    %v613 = vmul.f32 %v605, 0.5
    %v614 = vmul.f32 %v606, 0.5
    %v615 = vmul.f32 %v607, 0.5
    %v616 = vmul.f32 %v608, 0.5
    %v617 = vadd.f32 %v609, 0.5
    %v618 = vadd.f32 %v610, 0.5
    %v619 = vadd.f32 %v611, 0.5
    %v620 = vadd.f32 %v612, 0.5
    %v621 = vadd.f32 %v613, 0.5
    %v622 = vadd.f32 %v614, 0.5
    %v623 = vadd.f32 %v615, 0.5
    %v624 = vadd.f32 %v616, 0.5
    %v625 = vmul.f32 %v585, %v617
    %v626 = vmul.f32 %v586, %v618
    %v627 = vmul.f32 %v587, %v619
    %v628 = vmul.f32 %v588, %v620
    %v629 = vmul.f32 %v589, %v621
    %v630 = vmul.f32 %v590, %v622
    %v631 = vmul.f32 %v591, %v623
    %v632 = vmul.f32 %v592, %v624
    %v633 = vpack.c.bf16 %v627, %v625
    %v634 = vpack.c.bf16 %v628, %v626
    %v635 = vpack.c.bf16 %v631, %v629
    %v636 = vpack.c.bf16 %v632, %v630
    %v637 = vld [vmem:[%s6] sm:$0xf]
    %v638 = vld [vmem:[%s6 + $0x4] sm:$0xf]
    %v639 = vld [vmem:[%s6 + $0x8] sm:$0xf]
    %v640 = vld [vmem:[%s6 + $0xc] sm:$0xf]
    %v641 = vld [vmem:[%s6 + $0x10] sm:$0xf]
    %v647 = vunpack.c.l.b16 %v637
    %v648 = vunpack.c.l.b16 %v638
    %v649 = vunpack.c.l.b16 %v639
    %v650 = vunpack.c.l.b16 %v640
    %v651 = vunpack.c.l.b16 %v641
    %v652 = vpack.c.b16 %v648, %v647
    %v653 = vpack.c.b16 %v650, %v649
    %v654 = vpack.c.b16 %v651, %v651
    %vm655 = vcmask 261120
    %v657 = vsel %vm655, %v652, 0
    %v660 = vsel %vm655, %v653, 0
    %v663 = vsel %vm655, %v654, 0
    %665 = vmatprep.subr.bf16.mxu0 %v634
    %666 = vmatpush1.bf16.msra.mxu0 %v633
    %667 = vmatprep.subr.bf16.mxu0 %v636
    %668 = vmatpush1.bf16.msra.mxu0 %v635
    %669 = vmatprep.subr.bf16.mxu0 0
    %670 = vmatpush1.bf16.msra.mxu0 0
    %671 = vmatprep.subr.bf16.mxu0 0
    %672 = vmatpush1.bf16.msra.mxu0 0
    %673 = vmatprep.subr.bf16.mxu0 0
    %674 = vmatpush1.bf16.msra.mxu0 0
    %675 = vmatprep.subr.bf16.mxu0 0
    %676 = vmatpush1.bf16.msra.mxu0 0
    %677 = vmatprep.subr.bf16.mxu0 0
    %678 = vmatpush1.bf16.msra.mxu0 0
    %679 = vmatprep.subr.bf16.mxu0 0
    %680 = vmatpush1.bf16.msra.mxu0 0
    %681 = vmatprep.subr.bf16.mxu0 0
    %682 = vmatpush1.bf16.msra.mxu0 0
    %683 = vmatprep.subr.bf16.mxu0 0
    %684 = vmatpush1.bf16.msra.mxu0 0
    %685 = vmatprep.subr.bf16.mxu0 0
    %686 = vmatpush1.bf16.msra.mxu0 0
    %687 = vmatprep.subr.bf16.mxu0 0
    %688 = vmatpush1.bf16.msra.mxu0 0
    %689 = vmatprep.subr.bf16.mxu0 0
    %690 = vmatpush1.bf16.msra.mxu0 0
    %691 = vmatprep.subr.bf16.mxu0 0
    %692 = vmatpush1.bf16.msra.mxu0 0
    %693 = vmatprep.subr.bf16.mxu0 0
    %694 = vmatpush1.bf16.msra.mxu0 0
    %695 = vmatprep.subr.bf16.mxu0 0
    %696 = vmatpush1.bf16.msra.mxu0 0
    %697 = vmatprep.mubr.bf16.mxu0 0
    %698 = vmatmul.mubr.bf16.gmra.mrb[0].mxu0 %v657
    %v699 = vpop.f32.mrb[0].mxu0
    %v700 = vadd.f32 0.0, %v699
    %v701 = vpop.f32.mrb[0].mxu0
    %v702 = vadd.f32 0.0, %v701
    %v703 = vpop.f32.mrb[0].mxu0
    %v704 = vadd.f32 0.0, %v703
    %v705 = vpop.f32.mrb[0].mxu0
    %v706 = vadd.f32 0.0, %v705
    %707 = vmatprep.mubr.bf16.mxu0 0
    %708 = vmatmul.mubr.bf16.gmra.mrb[0].mxu0 %v660
    %v709 = vpop.f32.mrb[0].mxu0
    %v710 = vadd.f32 0.0, %v709
    %v711 = vpop.f32.mrb[0].mxu0
    %v712 = vadd.f32 0.0, %v711
    %v713 = vpop.f32.mrb[0].mxu0
    %v714 = vadd.f32 0.0, %v713
    %v715 = vpop.f32.mrb[0].mxu0
    %v716 = vadd.f32 0.0, %v715
    %717 = vmatprep.mubr.bf16.mxu0 0
    %718 = vmatmul.mubr.bf16.gmra.mrb[0].mxu0 %v663
    %v719 = vpop.f32.mrb[0].mxu0
    %v720 = vadd.f32 0.0, %v719
    %v721 = vpop.f32.mrb[0].mxu0
    %v722 = vadd.f32 0.0, %v721
    %v723 = vpop.f32.mrb[0].mxu0
    %v724 = vpop.f32.mrb[0].mxu0
    %725 = vdwg.mxu0
    %v726 = vadd.f32 %v330, %v700
    %v727 = vadd.f32 %v331, %v702
    %v728 = vadd.f32 %v332, %v704
    %v729 = vadd.f32 %v333, %v706
    %v730 = vadd.f32 %v334, %v710
    %v731 = vadd.f32 %v335, %v712
    %v732 = vadd.f32 %v336, %v714
    %v733 = vadd.f32 %v337, %v716
    %v734 = vld [vmem:[%s7] sm:$0xff]
    %v735 = vld [vmem:[%s7 + $0x8] sm:$0xff]
    %v736 = vld [vmem:[%s7 + $0x10] sm:$0xff]
    %v737 = vld [vmem:[%s7 + $0x18] sm:$0xff]
    %739 = vset.pattern.permute.xlu0 0
    %740 = vperm.xlu0 %739, %v734
    %v741 = vpop.permute.xlu0 %740
    %744 = vset.pattern.permute.xlu0 0
    %745 = vperm.xlu0 %744, %v735
    %v746 = vpop.permute.xlu0 %745
    %749 = vset.pattern.permute.xlu0 0
    %750 = vperm.xlu0 %749, %v736
    %v751 = vpop.permute.xlu0 %750
    %754 = vset.pattern.permute.xlu0 0
    %755 = vperm.xlu0 %754, %v737
    %v756 = vpop.permute.xlu0 %755
    %v758 = vadd.f32 %v726, %v741
    %v759 = vadd.f32 %v727, %v741
    %v760 = vadd.f32 %v728, %v746
    %v761 = vadd.f32 %v729, %v746
    %v762 = vadd.f32 %v730, %v751
    %v763 = vadd.f32 %v731, %v751
    %v764 = vadd.f32 %v732, %v756
    %v765 = vadd.f32 %v733, %v756
    %v766 = vadd.f32 %v720, 0.0
    %v767 = vadd.f32 %v722, 0.0
    %vm768 = vcmp.lt.s32.totalorder %v363, 2
    %vm769 = vcmp.lt.s32.totalorder %v364, 2
    %770 = vrot.lane.b32.xlu0 %v758, 2
    %v771 = vpop.permute.xlu0 %770
    %772 = vrot.lane.b32.xlu0 %v760, 2
    %v773 = vpop.permute.xlu0 %772
    %774 = vrot.lane.b32.xlu0 %v762, 2
    %v775 = vpop.permute.xlu0 %774
    %776 = vrot.lane.b32.xlu0 %v764, 2
    %v777 = vpop.permute.xlu0 %776
    %778 = vrot.lane.b32.xlu0 %v759, 2
    %v779 = vpop.permute.xlu0 %778
    %780 = vrot.lane.b32.xlu0 %v761, 2
    %v781 = vpop.permute.xlu0 %780
    %782 = vrot.lane.b32.xlu0 %v763, 2
    %v783 = vpop.permute.xlu0 %782
    %784 = vrot.lane.b32.xlu0 %v765, 2
    %v785 = vpop.permute.xlu0 %784
    %vm786 = vcmp.lt.s32.totalorder %v339, 2
    %v787 = vsel %vm786, %v771, %v779
    %v788 = vsel %vm786, %v773, %v781
    %v789 = vsel %vm786, %v775, %v783
    %v790 = vsel %vm786, %v777, %v785
    %v791 = vsel %vm786, %v779, %v771
    %v792 = vsel %vm786, %v781, %v773
    %v793 = vsel %vm786, %v783, %v775
    %v794 = vsel %vm786, %v785, %v777
    %v795 = vsel %vm768, 0.0, %v791
    %v796 = vsel %vm769, 0.0, %v787
    %v797 = vsel %vm768, 0.0, %v792
    %v798 = vsel %vm769, 0.0, %v788
    %v799 = vsel %vm768, 0.0, %v793
    %v800 = vsel %vm769, 0.0, %v789
    %v801 = vsel %vm768, 0.0, %v794
    %v802 = vsel %vm769, 0.0, %v790
    %vm803 = vcmp.ge.s32.totalorder %v363, 126
    %vm804 = vcmp.ge.s32.totalorder %v364, 126
    %805 = vrot.lane.b32.xlu0 %v758, 126
    %v806 = vpop.permute.xlu0 %805
    %807 = vrot.lane.b32.xlu0 %v760, 126
    %v808 = vpop.permute.xlu0 %807
    %809 = vrot.lane.b32.xlu0 %v762, 126
    %v810 = vpop.permute.xlu0 %809
    %811 = vrot.lane.b32.xlu0 %v764, 126
    %v812 = vpop.permute.xlu0 %811
    %813 = vrot.lane.b32.xlu0 %v759, 126
    %v814 = vpop.permute.xlu0 %813
    %815 = vrot.lane.b32.xlu0 %v761, 126
    %v816 = vpop.permute.xlu0 %815
    %817 = vrot.lane.b32.xlu0 %v763, 126
    %v818 = vpop.permute.xlu0 %817
    %819 = vrot.lane.b32.xlu0 %v765, 126
    %v820 = vpop.permute.xlu0 %819
    %vm821 = vcmp.lt.s32.totalorder %v339, 126
    %v822 = vsel %vm821, %v806, %v814
    %v823 = vsel %vm821, %v808, %v816
    %v824 = vsel %vm821, %v810, %v818
    %v825 = vsel %vm821, %v812, %v820
    %v826 = vsel %vm821, %v814, %v806
    %v827 = vsel %vm821, %v816, %v808
    %v828 = vsel %vm821, %v818, %v810
    %v829 = vsel %vm821, %v820, %v812
    %v830 = vsel %vm803, 0.0, %v822
    %v831 = vsel %vm804, 0.0, %v826
    %v832 = vsel %vm803, 0.0, %v823
    %v833 = vsel %vm804, 0.0, %v827
    %v834 = vsel %vm803, 0.0, %v824
    %v835 = vsel %vm804, 0.0, %v828
    %v836 = vsel %vm803, 0.0, %v825
    %v837 = vsel %vm804, 0.0, %v829
    %v838 = vpack.c.bf16 %v797, %v795
    %v839 = vpack.c.bf16 %v798, %v796
    %v840 = vpack.c.bf16 %v801, %v799
    %v841 = vpack.c.bf16 %v802, %v800
    %842 = vst [vmem:[#allocation2] sm:$0xff] %v838
    %843 = vst [vmem:[#allocation2 + $0x8] sm:$0xff] %v839
    %844 = vst [vmem:[#allocation2 + $0x10] sm:$0xff] %v840
    %845 = vst [vmem:[#allocation2 + $0x18] sm:$0xff] %v841
    %v846 = vpack.c.bf16 %v760, %v758
    %v847 = vpack.c.bf16 %v761, %v759
    %v848 = vpack.c.bf16 %v764, %v762
    %v849 = vpack.c.bf16 %v765, %v763
    %850 = vst [vmem:[#allocation2 + $0x20] sm:$0xff] %v846
    %851 = vst [vmem:[#allocation2 + $0x28] sm:$0xff] %v847
    %852 = vst [vmem:[#allocation2 + $0x30] sm:$0xff] %v848
    %853 = vst [vmem:[#allocation2 + $0x38] sm:$0xff] %v849
    %v854 = vpack.c.bf16 %v832, %v830
    %v855 = vpack.c.bf16 %v833, %v831
    %v856 = vpack.c.bf16 %v836, %v834
    %v857 = vpack.c.bf16 %v837, %v835
    %858 = vst [vmem:[#allocation2 + $0x40] sm:$0xff] %v854
    %859 = vst [vmem:[#allocation2 + $0x48] sm:$0xff] %v855
    %860 = vst [vmem:[#allocation2 + $0x50] sm:$0xff] %v856
    %861 = vst [vmem:[#allocation2 + $0x58] sm:$0xff] %v857
    %s862 = scalar_lea.vmem %s5, 32
    %v863 = vld [vmem:[%s862] sm:$0xf]
    %v864 = vld [vmem:[%s862 + $0x4] sm:$0xf]
    %v865 = vld [vmem:[%s862 + $0x8] sm:$0xf]
    %v866 = vld [vmem:[%s862 + $0xc] sm:$0xf]
    %v867 = vld [vmem:[%s862 + $0x10] sm:$0xf]
    %v868 = vld [vmem:[%s862 + $0x14] sm:$0xf]
    %v869 = vld [vmem:[%s862 + $0x18] sm:$0xf]
    %v870 = vld [vmem:[%s862 + $0x1c] sm:$0xf]
    %v871 = vld [vmem:[#allocation2] sm:$0xff]
    %v872 = vld [vmem:[#allocation2 + $0x8] sm:$0xff]
    %v873 = vld [vmem:[#allocation2 + $0x10] sm:$0xff]
    %v874 = vld [vmem:[#allocation2 + $0x18] sm:$0xff]
    %v875 = vld [vmem:[#allocation2 + $0x20] sm:$0xff]
    %v876 = vld [vmem:[#allocation2 + $0x28] sm:$0xff]
    %v877 = vld [vmem:[#allocation2 + $0x30] sm:$0xff]
    %v878 = vld [vmem:[#allocation2 + $0x38] sm:$0xff]
    %v879 = vld [vmem:[#allocation2 + $0x40] sm:$0xff]
    %v880 = vld [vmem:[#allocation2 + $0x48] sm:$0xff]
    %v881 = vld [vmem:[#allocation2 + $0x50] sm:$0xff]
    %v882 = vld [vmem:[#allocation2 + $0x58] sm:$0xff]
    %v891 = vunpack.c.l.b16 %v863
    %v892 = vunpack.c.l.b16 %v864
    %v893 = vunpack.c.l.b16 %v865
    %v894 = vunpack.c.l.b16 %v866
    %v895 = vunpack.c.l.b16 %v867
    %v896 = vunpack.c.l.b16 %v868
    %v897 = vunpack.c.l.b16 %v869
    %v898 = vunpack.c.l.b16 %v870
    %v899 = vpack.c.b16 %v892, %v891
    %v900 = vpack.c.b16 %v894, %v893
    %v901 = vpack.c.b16 %v896, %v895
    %v902 = vpack.c.b16 %v898, %v897
    %v904 = vsel %vm499, %v899, 0
    %v907 = vsel %vm499, %v900, 0
    %v910 = vsel %vm499, %v901, 0
    %v913 = vsel %vm499, %v902, 0
    %915 = vmatprep.subr.bf16.mxu0 %v872
    %916 = vmatpush1.bf16.msra.mxu0 %v871
    %917 = vmatprep.subr.bf16.mxu0 %v874
    %918 = vmatpush1.bf16.msra.mxu0 %v873
    %919 = vmatprep.subr.bf16.mxu0 %v876
    %920 = vmatpush1.bf16.msra.mxu0 %v875
    %921 = vmatprep.subr.bf16.mxu0 %v878
    %922 = vmatpush1.bf16.msra.mxu0 %v877
    %923 = vmatprep.subr.bf16.mxu0 %v880
    %924 = vmatpush1.bf16.msra.mxu0 %v879
    %925 = vmatprep.subr.bf16.mxu0 %v882
    %926 = vmatpush1.bf16.msra.mxu0 %v881
    %927 = vmatprep.subr.bf16.mxu0 0
    %928 = vmatpush1.bf16.msra.mxu0 0
    %929 = vmatprep.subr.bf16.mxu0 0
    %930 = vmatpush1.bf16.msra.mxu0 0
    %931 = vmatprep.subr.bf16.mxu0 0
    %932 = vmatpush1.bf16.msra.mxu0 0
    %933 = vmatprep.subr.bf16.mxu0 0
    %934 = vmatpush1.bf16.msra.mxu0 0
    %935 = vmatprep.subr.bf16.mxu0 0
    %936 = vmatpush1.bf16.msra.mxu0 0
    %937 = vmatprep.subr.bf16.mxu0 0
    %938 = vmatpush1.bf16.msra.mxu0 0
    %939 = vmatprep.subr.bf16.mxu0 0
    %940 = vmatpush1.bf16.msra.mxu0 0
    %941 = vmatprep.subr.bf16.mxu0 0
    %942 = vmatpush1.bf16.msra.mxu0 0
    %943 = vmatprep.subr.bf16.mxu0 0
    %944 = vmatpush1.bf16.msra.mxu0 0
    %945 = vmatprep.subr.bf16.mxu0 0
    %946 = vmatpush1.bf16.msra.mxu0 0
    %947 = vmatprep.mubr.bf16.mxu0 0
    %948 = vmatmul.mubr.bf16.gmra.mrb[0].mxu0 %v904
    %v949 = vpop.f32.mrb[0].mxu0
    %v950 = vadd.f32 %v205, %v949
    %v951 = vpop.f32.mrb[0].mxu0
    %v952 = vadd.f32 %v207, %v951
    %v953 = vpop.f32.mrb[0].mxu0
    %v954 = vadd.f32 %v209, %v953
    %v955 = vpop.f32.mrb[0].mxu0
    %v956 = vadd.f32 %v211, %v955
    %957 = vmatprep.mubr.bf16.mxu0 0
    %958 = vmatmul.mubr.bf16.gmra.mrb[0].mxu0 %v907
    %v959 = vpop.f32.mrb[0].mxu0
    %v960 = vadd.f32 %v215, %v959
    %v961 = vpop.f32.mrb[0].mxu0
    %v962 = vadd.f32 %v217, %v961
    %v963 = vpop.f32.mrb[0].mxu0
    %v964 = vadd.f32 %v219, %v963
    %v965 = vpop.f32.mrb[0].mxu0
    %v966 = vadd.f32 %v221, %v965
    %967 = vmatprep.mubr.bf16.mxu0 0
    %968 = vmatmul.mubr.bf16.gmra.mrb[0].mxu0 %v910
    %v969 = vpop.f32.mrb[0].mxu0
    %v970 = vadd.f32 %v225, %v969
    %v971 = vpop.f32.mrb[0].mxu0
    %v972 = vadd.f32 %v227, %v971
    %v973 = vpop.f32.mrb[0].mxu0
    %v974 = vadd.f32 %v229, %v973
    %v975 = vpop.f32.mrb[0].mxu0
    %v976 = vadd.f32 %v231, %v975
    %977 = vmatprep.mubr.bf16.mxu0 0
    %978 = vmatmul.mubr.bf16.gmra.mrb[0].mxu0 %v913
    %v979 = vpop.f32.mrb[0].mxu0
    %v980 = vadd.f32 %v235, %v979
    %v981 = vpop.f32.mrb[0].mxu0
    %v982 = vadd.f32 %v237, %v981
    %v983 = vpop.f32.mrb[0].mxu0
    %v984 = vadd.f32 %v239, %v983
    %v985 = vpop.f32.mrb[0].mxu0
    %v986 = vadd.f32 %v241, %v985
    %987 = vdwg.mxu0
    %v988 = vtanh.pop %v950
    %v989 = vtanh.pop %v952
    %v990 = vtanh.pop %v954
    %v991 = vtanh.pop %v956
    %v992 = vtanh.pop %v960
    %v993 = vtanh.pop %v962
    %v994 = vtanh.pop %v964
    %v995 = vtanh.pop %v966
    %v996 = vmul.f32 %v970, 0.5
    %v997 = vmul.f32 %v972, 0.5
    %v998 = vmul.f32 %v974, 0.5
    %v999 = vmul.f32 %v976, 0.5
    %v1000 = vmul.f32 %v980, 0.5
    %v1001 = vmul.f32 %v982, 0.5
    %v1002 = vmul.f32 %v984, 0.5
    %v1003 = vmul.f32 %v986, 0.5
    %v1004 = vtanh.pop %v996
    %v1005 = vtanh.pop %v997
    %v1006 = vtanh.pop %v998
    %v1007 = vtanh.pop %v999
    %v1008 = vtanh.pop %v1000
    %v1009 = vtanh.pop %v1001
    %v1010 = vtanh.pop %v1002
    %v1011 = vtanh.pop %v1003
    %v1012 = vmul.f32 %v1004, 0.5
    %v1013 = vmul.f32 %v1005, 0.5
    %v1014 = vmul.f32 %v1006, 0.5
    %v1015 = vmul.f32 %v1007, 0.5
    %v1016 = vmul.f32 %v1008, 0.5
    %v1017 = vmul.f32 %v1009, 0.5
    %v1018 = vmul.f32 %v1010, 0.5
    %v1019 = vmul.f32 %v1011, 0.5
    %v1020 = vadd.f32 %v1012, 0.5
    %v1021 = vadd.f32 %v1013, 0.5
    %v1022 = vadd.f32 %v1014, 0.5
    %v1023 = vadd.f32 %v1015, 0.5
    %v1024 = vadd.f32 %v1016, 0.5
    %v1025 = vadd.f32 %v1017, 0.5
    %v1026 = vadd.f32 %v1018, 0.5
    %v1027 = vadd.f32 %v1019, 0.5
    %v1028 = vmul.f32 %v988, %v1020
    %v1029 = vmul.f32 %v989, %v1021
    %v1030 = vmul.f32 %v990, %v1022
    %v1031 = vmul.f32 %v991, %v1023
    %v1032 = vmul.f32 %v992, %v1024
    %v1033 = vmul.f32 %v993, %v1025
    %v1034 = vmul.f32 %v994, %v1026
    %v1035 = vmul.f32 %v995, %v1027
    %v1036 = vpack.c.bf16 %v1030, %v1028
    %v1037 = vpack.c.bf16 %v1031, %v1029
    %v1038 = vpack.c.bf16 %v1034, %v1032
    %v1039 = vpack.c.bf16 %v1035, %v1033
    %v1040 = vld [vmem:[%s8] sm:$0xf]
    %v1042 = vsel %vm655, %v1040, 0
    %1044 = vmatprep.subr.bf16.mxu0 %v1037
    %1045 = vmatpush1.bf16.msra.mxu0 %v1036
    %1046 = vmatprep.subr.bf16.mxu0 %v1039
    %1047 = vmatpush1.bf16.msra.mxu0 %v1038
    %1048 = vmatprep.subr.bf16.mxu0 0
    %1049 = vmatpush1.bf16.msra.mxu0 0
    %1050 = vmatprep.subr.bf16.mxu0 0
    %1051 = vmatpush1.bf16.msra.mxu0 0
    %1052 = vmatprep.subr.bf16.mxu0 0
    %1053 = vmatpush1.bf16.msra.mxu0 0
    %1054 = vmatprep.subr.bf16.mxu0 0
    %1055 = vmatpush1.bf16.msra.mxu0 0
    %1056 = vmatprep.subr.bf16.mxu0 0
    %1057 = vmatpush1.bf16.msra.mxu0 0
    %1058 = vmatprep.subr.bf16.mxu0 0
    %1059 = vmatpush1.bf16.msra.mxu0 0
    %1060 = vmatprep.subr.bf16.mxu0 0
    %1061 = vmatpush1.bf16.msra.mxu0 0
    %1062 = vmatprep.subr.bf16.mxu0 0
    %1063 = vmatpush1.bf16.msra.mxu0 0
    %1064 = vmatprep.subr.bf16.mxu0 0
    %1065 = vmatpush1.bf16.msra.mxu0 0
    %1066 = vmatprep.subr.bf16.mxu0 0
    %1067 = vmatpush1.bf16.msra.mxu0 0
    %1068 = vmatprep.subr.bf16.mxu0 0
    %1069 = vmatpush1.bf16.msra.mxu0 0
    %1070 = vmatprep.subr.bf16.mxu0 0
    %1071 = vmatpush1.bf16.msra.mxu0 0
    %1072 = vmatprep.subr.bf16.mxu0 0
    %1073 = vmatpush1.bf16.msra.mxu0 0
    %1074 = vmatprep.subr.bf16.mxu0 0
    %1075 = vmatpush1.bf16.msra.mxu0 0
    %1076 = vmatprep.mubr.bf16.mxu0 0
    %1077 = vmatmul.mubr.bf16.gmra.mrb[0].mxu0 %v1042
    %v1078 = vpop.f32.mrb[0].mxu0
    %v1079 = vadd.f32 0.0, %v1078
    %v1080 = vpop.f32.mrb[0].mxu0
    %v1081 = vadd.f32 0.0, %v1080
    %v1082 = vpop.f32.mrb[0].mxu0
    %v1083 = vpop.f32.mrb[0].mxu0
    %1084 = vdwg.mxu0
    %v1085 = vadd.f32 %v766, %v1079
    %v1086 = vadd.f32 %v767, %v1081
    %v1087 = vld [vmem:[%s9] sm:$0xff]
    %1089 = vset.pattern.permute.xlu0 0
    %1090 = vperm.xlu0 %1089, %v1087
    %v1091 = vpop.permute.xlu0 %1090
    %v1093 = vadd.f32 %v1085, %v1091
    %v1094 = vadd.f32 %v1086, %v1091
    %v1095 = vld [vmem:[%s1] sm:$0xff]
    %v1096 = vmul.f32 %v1093, 1.442695
    %v1097 = vpow.pop %v1096
    %v1098 = vmul.f32 %v1094, 1.442695
    %v1099 = vpow.pop %v1098
    %v1102 = vcombine.low %v1097, %v1099
    %v1104 = vmul.f32 %v1095, %v1102
    %v1107 = vcombine.high %v1093, %v1094
    %v1109 = vadd.f32 %v1104, %v1107
    %v1111 = vcombine.high %v1109, %v1109
    %1113 = vst [vmem:[#allocation3] sm:$0xf] %v1109
    %1114 = vst [vmem:[#allocation3 + $0x8] sm:$0xf] %v1111
    %v1115 = vrot.slane %v1093, 4
    %v1116 = vrot.slane %v1094, 4
    %1119 = vst [vmem:[#allocation3] sm:$0xf0] %v1115
    %1120 = vst [vmem:[#allocation3 + $0x8] sm:$0xf0] %v1116
    // Predicated region
    $region42: #{tpu_custom_call.1} parent=1 // pred_check
      _
    $region43: #{tpu_custom_call.1} parent=1 // pred_check_branch
      %1122 = sbr.rel (0) target = $region45
    $region44: #{tpu_custom_call.1} parent=1 // pred_region
      %s1124 = ssub.s32 256, 256
      %1125 = vsyncadd [#allocation4], %s1124
      %s1127 = sshll.u32 [#allocation3], 4
      %s1128 = int_to_ptr.vmem [resolvable:$true] %s1127
      %1130 = dma.vmem_to_hbm [thread:$0]  %s1128, 256, %s10, [#allocation4]
    $region45: #{tpu_custom_call.1} parent=1 // pred_fallthru
      _
    // Predicated region
    $region46: #{tpu_custom_call.1} parent=1 // pred_check
      _
    $region47: #{tpu_custom_call.1} parent=1 // pred_check_branch
      %1132 = sbr.rel (0) target = $region49
    $region48: #{tpu_custom_call.1} parent=1 // pred_region
      %1133 = dma.done [#allocation4], 256
    $region49: #{tpu_custom_call.1} parent=1 // pred_fallthru
      _
    %1134 = vsyncpa [#allocation4], 1

</llo_original>
